<compile_context>
chip_gen: v7x
topology: tpu7x:2x2x1
jax: 0.10.0
libtpu: 0.0.40
codegen_flags: <defaults>
</compile_context>

<pallas_src>
import jax
import jax.numpy as jnp
from jax.experimental import pallas as pl
from jax.experimental.pallas import tpu as pltpu


def _round_up(n, m):
    return ((n + m - 1) // m) * m


def _mlp_kernel(x_ref, w1_ref, b1_ref, w2_ref, b2_ref, o_ref):
    # x_ref:  [TB, F]   f32 (or bf16) -> cast to bf16 in-kernel at the MXU boundary
    # w1_ref: [F, H]    bf16 (VMEM-resident: constant index_map)
    # b1_ref: [1, H]    f32  (VMEM-resident)
    # w2_ref: [H, Cp]   bf16 (VMEM-resident, classes padded to 128 lanes)
    # b2_ref: [1, Cp]   f32  (VMEM-resident)
    # o_ref:  [TB, Cp]  bf16 (lane-dense unmasked store)

    # Cast activations on the VPU (kernel is mem-bound, not VALU-bound); avoids
    # a separate wrapper-side bf16 copy of x through HBM.
    x = x_ref[...].astype(jnp.bfloat16)
    # First linear layer: bf16 MXU matmul, f32 accumulation.
    h = jnp.dot(x, w1_ref[...], preferred_element_type=jnp.float32) + b1_ref[...]
    # SiLU in f32: x * sigmoid(x) (sigmoid on the EUP; v5e has no bf16 VPU/EUP path).
    h = h * jax.nn.sigmoid(h)
    # Dropout(0.1) -> identity in eval mode.
    # Second linear layer: cast activations to bf16 at the MXU boundary only.
    out = jnp.dot(h.astype(jnp.bfloat16), w2_ref[...],
                  preferred_element_type=jnp.float32) + b2_ref[...]
    # bf16 logits; Cp is a multiple of 128 -> unmasked lane-dense vst.
    o_ref[...] = out.astype(o_ref.dtype)


def prepare_digit_classifier_params(w1, b1, w2, b2):
    """One-time weight prep: pad classes to 128 lanes, cast matmul weights to bf16.

    Hoisted out of the per-call forward path so each forward does not re-read
    the f32 weights and re-write bf16 copies through HBM.
    """
    F, H = w1.shape
    C = w2.shape[1]
    C_pad = _round_up(C, 128)
    w1_bf = jnp.asarray(w1, jnp.float32).astype(jnp.bfloat16)
    w2_bf = jnp.pad(jnp.asarray(w2, jnp.float32),
                    ((0, 0), (0, C_pad - C))).astype(jnp.bfloat16)
    # Biases as [1, dim] f32 rows so they broadcast over the batch sublanes.
    b1_2d = jnp.asarray(b1, jnp.float32).reshape(1, H)
    b2_2d = jnp.pad(jnp.asarray(b2, jnp.float32), ((0, C_pad - C),)).reshape(1, C_pad)
    return {"w1": w1_bf, "b1": b1_2d, "w2": w2_bf, "b2": b2_2d, "num_classes": C}


def _choose_batch_tile(B, block_b):
    """Pick the batch tile TB and the (possibly padded) batch extent.

    Prefers (a) a TB that divides B exactly (avoids a jnp.pad copy of x) and
    (b) >= 2 grid steps so dimension_semantics=("parallel",) can shard across
    v7x's two TensorCores. Falls back to minimal 8-row padding otherwise.
    """
    candidates = [t for t in (512, 256, 128, 64, 32, 16, 8) if t <= block_b]
    for t in candidates:                       # exact divisor and >= 2 grid steps
        if B % t == 0 and B // t >= 2:
            return t, B
    for t in candidates:                       # exact divisor, single step
        if B % t == 0:
            return t, B
    TB = min(block_b, _round_up(B, 8))         # ragged batch: pad up
    return TB, _round_up(B, TB)


def digit_classifier_forward(x, params, *, block_b=512):
    """x: [B, F] (f32 or bf16); params from prepare_digit_classifier_params.

    Returns bf16 logits of shape [B, num_classes] (f32-accumulated in-kernel).
    """
    w1_bf, b1_2d = params["w1"], params["b1"]
    w2_bf, b2_2d = params["w2"], params["b2"]
    C = params["num_classes"]

    B, F = x.shape
    H = w1_bf.shape[1]
    C_pad = w2_bf.shape[1]

    TB, B_pad = _choose_batch_tile(B, block_b)
    x_p = x if B_pad == B else jnp.pad(x, ((0, B_pad - B), (0, 0)))
    grid = (B_pad // TB,)

    x_bytes = x_p.dtype.itemsize

    cost = pl.CostEstimate(
        flops=2 * B_pad * (F * H + H * C_pad),
        transcendentals=B_pad * H,                       # sigmoid in SiLU
        bytes_accessed=(x_bytes * B_pad * F              # x read once (no wrapper copy)
                        + 2 * (F * H + H * C_pad)        # bf16 weights
                        + 4 * (H + C_pad)                # f32 biases
                        + 2 * B_pad * C_pad),            # bf16 logits writeback
    )

    # VMEM budget: double-buffered x/out tiles + resident weights + f32
    # intermediates (lane dims counted padded to 128). Generous 2x margin.
    vmem_bytes = (
        2 * TB * max(F, 128) * x_bytes                               # x tiles
        + 2 * TB * C_pad * 2                                         # out tiles (bf16)
        + 2 * (F * H * 2 + H * 4 + H * C_pad * 2 + C_pad * 4)        # weights/biases
        + TB * max(H, 128) * 4 + TB * C_pad * 4                      # f32 intermediates
    )
    vmem_limit = int(min(64 * 1024 * 1024, max(4 * 1024 * 1024, 2 * vmem_bytes)))

    out = pl.pallas_call(
        _mlp_kernel,
        out_shape=jax.ShapeDtypeStruct((B_pad, C_pad), jnp.bfloat16),
        grid=grid,
        in_specs=[
            pl.BlockSpec((TB, F), lambda i: (i, 0)),       # x: pipelined over batch
            pl.BlockSpec((F, H), lambda i: (0, 0)),        # w1: resident
            pl.BlockSpec((1, H), lambda i: (0, 0)),        # b1: resident
            pl.BlockSpec((H, C_pad), lambda i: (0, 0)),    # w2: resident
            pl.BlockSpec((1, C_pad), lambda i: (0, 0)),    # b2: resident
        ],
        out_specs=pl.BlockSpec((TB, C_pad), lambda i: (i, 0)),
        compiler_params=pltpu.CompilerParams(
            dimension_semantics=("parallel",),             # batch axis -> megacore on v7x
            vmem_limit_bytes=vmem_limit,
        ),
        cost_estimate=cost,
    )(x_p, w1_bf, b1_2d, w2_bf, b2_2d)

    # Drop the batch/class padding. (Ideally the downstream softmax/argmax is
    # fused so this slice's extra read of the padded block disappears.)
    return out[:B, :C]


def reference_forward(x, w1, b1, w2, b2):
    h = x @ w1 + b1
    h = h * jax.nn.sigmoid(h)
    return h @ w2 + b2


if __name__ == "__main__":
    # Small shapes consistent with the module: in_features=32 -> hidden=64, 10 classes.
    B, F, C = 8, 32, 10
    H = F * 2

    key = jax.random.PRNGKey(0)
    kx, kw1, kb1, kw2, kb2 = jax.random.split(key, 5)

    x = jax.random.normal(kx, (B, F), dtype=jnp.float32)
    # Deterministic parameter init (PyTorch-style uniform bounds).
    bound1 = 1.0 / (F ** 0.5)
    w1 = jax.random.uniform(kw1, (F, H), minval=-bound1, maxval=bound1, dtype=jnp.float32)
    b1 = jax.random.uniform(kb1, (H,), minval=-bound1, maxval=bound1, dtype=jnp.float32)
    bound2 = 1.0 / (H ** 0.5)
    w2 = jax.random.uniform(kw2, (H, C), minval=-bound2, maxval=bound2, dtype=jnp.float32)
    b2 = jax.random.uniform(kb2, (C,), minval=-bound2, maxval=bound2, dtype=jnp.float32)

    # One-time weight prep, outside the per-call path.
    params = prepare_digit_classifier_params(w1, b1, w2, b2)

    out = digit_classifier_forward(x, params)
    out = jax.block_until_ready(out)

    ref = reference_forward(x, w1, b1, w2, b2)
    assert out.shape == (B, C)
    assert out.dtype == jnp.bfloat16
    # Tolerance loosened vs pure-f32: bf16 MXU operands and bf16 logits (f32 accumulation).
    assert jnp.allclose(out.astype(jnp.float32), ref, atol=5e-2, rtol=5e-2), \
        "Pallas output mismatch vs reference"

    print("KERNEL_OK")
</pallas_src>

<mosaic_0001>
module attributes {stable_mosaic.version = 11 : i64} {
  func.func @_mlp_kernel(%arg0: i32, %arg1: memref<8x32xf32, #tpu.memory_space<vmem>>, %arg2: memref<32x64xbf16, #tpu.memory_space<vmem>>, %arg3: memref<1x64xf32, #tpu.memory_space<vmem>>, %arg4: memref<64x128xbf16, #tpu.memory_space<vmem>>, %arg5: memref<1x128xf32, #tpu.memory_space<vmem>>, %arg6: memref<8x128xbf16, #tpu.memory_space<vmem>>) attributes {dimension_semantics = [#tpu.dimension_semantics<parallel>], iteration_bounds = array<i64: 1>, scalar_prefetch = 0 : i64, scratch_operands = 0 : i64, tpu.core_type = #tpu.core_type<tc>, window_params = [{transform_indices = @transform_0, window_bounds = array<i64: 8, 32>}, {pipeline_mode = #tpu.pipeline_mode<synchronous>, transform_indices = @transform_1, window_bounds = array<i64: 32, 64>}, {pipeline_mode = #tpu.pipeline_mode<synchronous>, transform_indices = @transform_2, window_bounds = array<i64: 1, 64>}, {pipeline_mode = #tpu.pipeline_mode<synchronous>, transform_indices = @transform_3, window_bounds = array<i64: 64, 128>}, {pipeline_mode = #tpu.pipeline_mode<synchronous>, transform_indices = @transform_4, window_bounds = array<i64: 1, 128>}, {transform_indices = @transform_5, window_bounds = array<i64: 8, 128>}]} {
    %c0 = arith.constant 0 : index
    %c0_0 = arith.constant 0 : index
    %0 = vector.load %arg1[%c0, %c0_0] : memref<8x32xf32, #tpu.memory_space<vmem>>, vector<8x32xf32>
    %1 = arith.truncf %0 : vector<8x32xf32> to vector<8x32xbf16>
    %c0_1 = arith.constant 0 : index
    %c0_2 = arith.constant 0 : index
    %2 = vector.load %arg2[%c0_1, %c0_2] : memref<32x64xbf16, #tpu.memory_space<vmem>>, vector<32x64xbf16>
    %cst = arith.constant dense<0.000000e+00> : vector<8x64xf32>
    %3 = tpu.matmul %1, %2, %cst {dimension_numbers = #tpu.dot_dimension_numbers<[1], [0], [0], [1], [0, 0, 1, 1], [], []>} : vector<8x32xbf16>, vector<32x64xbf16>, vector<8x64xf32> -> vector<8x64xf32>
    %c0_3 = arith.constant 0 : index
    %c0_4 = arith.constant 0 : index
    %4 = vector.load %arg3[%c0_3, %c0_4] : memref<1x64xf32, #tpu.memory_space<vmem>>, vector<1x64xf32>
    %5 = vector.broadcast %4 : vector<1x64xf32> to vector<8x64xf32>
    %6 = arith.addf %3, %5 : vector<8x64xf32>
    %7 = arith.negf %6 : vector<8x64xf32>
    %8 = math.exp %7 : vector<8x64xf32>
    %cst_5 = arith.constant 1.000000e+00 : f32
    %9 = vector.broadcast %cst_5 : f32 to vector<8x64xf32>
    %10 = arith.addf %9, %8 : vector<8x64xf32>
    %11 = arith.divf %9, %10 : vector<8x64xf32>
    %12 = arith.mulf %6, %11 : vector<8x64xf32>
    %13 = arith.truncf %12 : vector<8x64xf32> to vector<8x64xbf16>
    %c0_6 = arith.constant 0 : index
    %c0_7 = arith.constant 0 : index
    %14 = vector.load %arg4[%c0_6, %c0_7] : memref<64x128xbf16, #tpu.memory_space<vmem>>, vector<64x128xbf16>
    %cst_8 = arith.constant dense<0.000000e+00> : vector<8x128xf32>
    %15 = tpu.matmul %13, %14, %cst_8 {dimension_numbers = #tpu.dot_dimension_numbers<[1], [0], [0], [1], [0, 0, 1, 1], [], []>} : vector<8x64xbf16>, vector<64x128xbf16>, vector<8x128xf32> -> vector<8x128xf32>
    %c0_9 = arith.constant 0 : index
    %c0_10 = arith.constant 0 : index
    %16 = vector.load %arg5[%c0_9, %c0_10] : memref<1x128xf32, #tpu.memory_space<vmem>>, vector<1x128xf32>
    %17 = vector.broadcast %16 : vector<1x128xf32> to vector<8x128xf32>
    %18 = arith.addf %15, %17 : vector<8x128xf32>
    %19 = arith.truncf %18 : vector<8x128xf32> to vector<8x128xbf16>
    %c0_11 = arith.constant 0 : index
    %c0_12 = arith.constant 0 : index
    %20 = vector.load %arg6[%c0_11, %c0_12] : memref<8x128xbf16, #tpu.memory_space<vmem>>, vector<8x128xbf16>
    tpu.vector_store %arg6[%c0_11, %c0_12], %19 {strides = array<i32>} : memref<8x128xbf16, #tpu.memory_space<vmem>>, vector<8x128xbf16>,
    return
  }
  func.func @transform_0(%arg0: i32) -> (i32, i32) {
    %c0_i32 = arith.constant 0 : i32
    %c0_i32_0 = arith.constant 0 : i32
    return %arg0, %c0_i32 : i32, i32
  }
  func.func @transform_1(%arg0: i32) -> (i32, i32) {
    %c0_i32 = arith.constant 0 : i32
    %c0_i32_0 = arith.constant 0 : i32
    %c0_i32_1 = arith.constant 0 : i32
    return %c0_i32, %c0_i32_0 : i32, i32
  }
  func.func @transform_2(%arg0: i32) -> (i32, i32) {
    %c0_i32 = arith.constant 0 : i32
    %c0_i32_0 = arith.constant 0 : i32
    %c0_i32_1 = arith.constant 0 : i32
    return %c0_i32, %c0_i32_0 : i32, i32
  }
  func.func @transform_3(%arg0: i32) -> (i32, i32) {
    %c0_i32 = arith.constant 0 : i32
    %c0_i32_0 = arith.constant 0 : i32
    %c0_i32_1 = arith.constant 0 : i32
    return %c0_i32, %c0_i32_0 : i32, i32
  }
  func.func @transform_4(%arg0: i32) -> (i32, i32) {
    %c0_i32 = arith.constant 0 : i32
    %c0_i32_0 = arith.constant 0 : i32
    %c0_i32_1 = arith.constant 0 : i32
    return %c0_i32, %c0_i32_0 : i32, i32
  }
  func.func @transform_5(%arg0: i32) -> (i32, i32) {
    %c0_i32 = arith.constant 0 : i32
    %c0_i32_0 = arith.constant 0 : i32
    return %arg0, %c0_i32 : i32, i32
  }
}

</mosaic_0001>

<llo_original>
// kernel: tpu_custom_call.1
$region0: #{tpu_custom_call.1}
  #allocation0 [shape = 'u32[]', space=smem, size = 0x4, offset = 0x4, fixed_abs, tag = 'smem constant byte address 0x4 - core index']
  #allocation1 [shape = 'u32[144,128]{1,0:T(1,128)}', space=vmem, size = 0x12000, scoped, tag = 'internal scratch']
  %s0 = inlined_call_operand.hbm [shape: f32[8,32], index: 0, kind: input, shape index: {}]
  %s1 = inlined_call_operand.hbm [shape: bf16[32,64], index: 1, kind: input, shape index: {}]
  %s2 = inlined_call_operand.vmem [shape: f32[1,64], index: 2, kind: input, shape index: {}]
  %s3 = inlined_call_operand.hbm [shape: bf16[64,128], index: 3, kind: input, shape index: {}]
  %s4 = inlined_call_operand.vmem [shape: f32[1,128], index: 4, kind: input, shape index: {}]
  %s5 = inlined_call_operand.hbm [shape: bf16[8,128], index: 5, kind: output, shape index: {}]
  %s6 = sld [smem:[#allocation0]]
  $region42: #{tpu_custom_call.1} parent=0
    _
  %s8 = ssub.s32 1, %s6
  %s9 = scalar_select 0, %s8, %s6
  $region1: #{tpu_custom_call.1} parent=0
    #allocation2 [shape = 'u8[4096]{0}', space=vmem, size = 0x1000, scoped, tag = 'input window, operand 0, single buffered']
    #allocation3 [shape = 's32[1]{0}', space=sflag, size = 0x4, scoped, tag = 'scoped memory for tpu_custom_call.1']
    #allocation4 [shape = 's32[1]{0}', space=sflag, size = 0x4, scoped, tag = 'scoped memory for tpu_custom_call.1']
    #allocation5 [shape = 'u8[8192]{0}', space=vmem, size = 0x2000, scoped, tag = 'input window, operand 1, single buffered']
    #allocation6 [shape = 's32[1]{0}', space=sflag, size = 0x4, scoped, tag = 'scoped memory for tpu_custom_call.1']
    #allocation7 [shape = 'u8[16384]{0}', space=vmem, size = 0x4000, scoped, tag = 'input window, operand 3, single buffered']
    #allocation8 [shape = 'u8[2048]{0}', space=vmem, size = 0x800, scoped, tag = 'output window, operand 0, single buffered']
    %10 = vsyncpa [#allocation3], 0
    %11 = vsyncpa [#allocation6], 0
    %12 = vsyncpa [#allocation4], 0
    // Predicated region
    $region2: #{tpu_custom_call.1} parent=1 // pred_check
      _
    $region3: #{tpu_custom_call.1} parent=1 // pred_check_branch
      %14 = sbr.rel (0) target = $region5
    $region4: #{tpu_custom_call.1} parent=1 // pred_region
      %s16 = ssub.s32 128, 128
      %17 = vsyncadd [#allocation3], %s16
      %s19 = sshll.u32 [#allocation2], 4
      %s20 = int_to_ptr.vmem [resolvable:$true] %s19
      %22 = dma.hbm_to_vmem [thread:$0]  %s0, 128, %s20, [#allocation3]
    $region5: #{tpu_custom_call.1} parent=1 // pred_fallthru
      _
    // Predicated region
    $region6: #{tpu_custom_call.1} parent=1 // pred_check
      _
    $region7: #{tpu_custom_call.1} parent=1 // pred_check_branch
      %24 = sbr.rel (0) target = $region9
    $region8: #{tpu_custom_call.1} parent=1 // pred_region
      %s26 = ssub.s32 256, 256
      %27 = vsyncadd [#allocation6], %s26
      %s28 = sshll.u32 [#allocation5], 4
      %s29 = int_to_ptr.vmem [resolvable:$true] %s28
      %34 = dma.hbm_to_vmem [thread:$0]  %s1, 256, %s29, [#allocation6], 64, 64, 4
    $region9: #{tpu_custom_call.1} parent=1 // pred_fallthru
      _
    // Predicated region
    $region10: #{tpu_custom_call.1} parent=1 // pred_check
      _
    $region11: #{tpu_custom_call.1} parent=1 // pred_check_branch
      %36 = sbr.rel (0) target = $region13
    $region12: #{tpu_custom_call.1} parent=1 // pred_region
      _
    $region13: #{tpu_custom_call.1} parent=1 // pred_fallthru
      _
    // Predicated region
    $region14: #{tpu_custom_call.1} parent=1 // pred_check
      _
    $region15: #{tpu_custom_call.1} parent=1 // pred_check_branch
      %38 = sbr.rel (0) target = $region17
    $region16: #{tpu_custom_call.1} parent=1 // pred_region
      %s40 = ssub.s32 512, 512
      %41 = vsyncadd [#allocation6], %s40
      %s42 = sshll.u32 [#allocation7], 4
      %s43 = int_to_ptr.vmem [resolvable:$true] %s42
      %48 = dma.hbm_to_vmem [thread:$0]  %s3, 512, %s43, [#allocation6], 64, 64, 4
    $region17: #{tpu_custom_call.1} parent=1 // pred_fallthru
      _
    // Predicated region
    $region18: #{tpu_custom_call.1} parent=1 // pred_check
      _
    $region19: #{tpu_custom_call.1} parent=1 // pred_check_branch
      %50 = sbr.rel (0) target = $region21
    $region20: #{tpu_custom_call.1} parent=1 // pred_region
      _
    $region21: #{tpu_custom_call.1} parent=1 // pred_fallthru
      _
    // Predicated region
    $region22: #{tpu_custom_call.1} parent=1 // pred_check
      _
    $region23: #{tpu_custom_call.1} parent=1 // pred_check_branch
      %52 = sbr.rel (0) target = $region25
    $region24: #{tpu_custom_call.1} parent=1 // pred_region
      %53 = dma.done [#allocation3], 128
    $region25: #{tpu_custom_call.1} parent=1 // pred_fallthru
      _
    // Predicated region
    $region26: #{tpu_custom_call.1} parent=1 // pred_check
      _
    $region27: #{tpu_custom_call.1} parent=1 // pred_check_branch
      %55 = sbr.rel (0) target = $region29
    $region28: #{tpu_custom_call.1} parent=1 // pred_region
      %56 = dma.done [#allocation6], 256
    $region29: #{tpu_custom_call.1} parent=1 // pred_fallthru
      _
    // Predicated region
    $region30: #{tpu_custom_call.1} parent=1 // pred_check
      _
    $region31: #{tpu_custom_call.1} parent=1 // pred_check_branch
      %58 = sbr.rel (0) target = $region33
    $region32: #{tpu_custom_call.1} parent=1 // pred_region
      %59 = dma.done [#allocation6], 512
    $region33: #{tpu_custom_call.1} parent=1 // pred_fallthru
      _
    %v61 = vld [vmem:[#allocation2] sm:$0xff]
    %v62 = vpack.c.bf16 %v61, %v61
    %v63 = vld [vmem:[#allocation5] sm:$0xf]
    %v64 = vld [vmem:[#allocation5 + $0x4] sm:$0xf]
    %v65 = vld [vmem:[#allocation5 + $0x8] sm:$0xf]
    %v66 = vld [vmem:[#allocation5 + $0xc] sm:$0xf]
    %v67 = vld [vmem:[%s2] sm:$0x1]
    %v69 = vlaneseq
    %v70 = vshrl.u32 %v69, 7
    %v71 = vsub.s32 0, %v70
    %v72 = vrot.slane %v67, %v71
    %v78 = vunpack.c.l.b16 %v63
    %v79 = vunpack.c.l.b16 %v64
    %v80 = vunpack.c.l.b16 %v65
    %v81 = vunpack.c.l.b16 %v66
    %v82 = vpack.c.b16 %v79, %v78
    %v83 = vpack.c.b16 %v81, %v80
    %vm86 = vcmask 261120
    %v88 = vsel %vm86, %v62, 0
    %90 = vmatprep.subr.bf16.mxu0 0
    %91 = vmatpush1.bf16.msra.mxu0 %v82
    %92 = vmatprep.subr.bf16.mxu0 0
    %93 = vmatpush1.bf16.msra.mxu0 %v83
    %94 = vmatprep.subr.bf16.mxu0 0
    %95 = vmatpush1.bf16.msra.mxu0 0
    %96 = vmatprep.subr.bf16.mxu0 0
    %97 = vmatpush1.bf16.msra.mxu0 0
    %98 = vmatprep.subr.bf16.mxu0 0
    %99 = vmatpush1.bf16.msra.mxu0 0
    %100 = vmatprep.subr.bf16.mxu0 0
    %101 = vmatpush1.bf16.msra.mxu0 0
    %102 = vmatprep.subr.bf16.mxu0 0
    %103 = vmatpush1.bf16.msra.mxu0 0
    %104 = vmatprep.subr.bf16.mxu0 0
    %105 = vmatpush1.bf16.msra.mxu0 0
    %106 = vmatprep.subr.bf16.mxu0 0
    %107 = vmatpush1.bf16.msra.mxu0 0
    %108 = vmatprep.subr.bf16.mxu0 0
    %109 = vmatpush1.bf16.msra.mxu0 0
    %110 = vmatprep.subr.bf16.mxu0 0
    %111 = vmatpush1.bf16.msra.mxu0 0
    %112 = vmatprep.subr.bf16.mxu0 0
    %113 = vmatpush1.bf16.msra.mxu0 0
    %114 = vmatprep.subr.bf16.mxu0 0
    %115 = vmatpush1.bf16.msra.mxu0 0
    %116 = vmatprep.subr.bf16.mxu0 0
    %117 = vmatpush1.bf16.msra.mxu0 0
    %118 = vmatprep.subr.bf16.mxu0 0
    %119 = vmatpush1.bf16.msra.mxu0 0
    %120 = vmatprep.subr.bf16.mxu0 0
    %121 = vmatpush1.bf16.msra.mxu0 0
    %122 = vmatprep.mubr.bf16.mxu0 0
    %123 = vmatmul.mubr.bf16.gmra.mrb[0].mxu0 %v88
    %v124 = vpop.f32.mrb[0].mxu0
    %v125 = vadd.f32 %v72, %v124
    %v126 = vpop.f32.mrb[0].mxu0
    %v127 = vpop.f32.mrb[0].mxu0
    %v128 = vpop.f32.mrb[0].mxu0
    %129 = vdwg.mxu0
    %v130 = vxor.u32 %v125, 2147483648
    %v131 = vmul.f32 %v130, 1.442695
    %v132 = vpow.pop %v131
    %v133 = vadd.f32 %v132, 1.0
    %v134 = vrcp.pop %v133
    %v135 = vmul.f32 1.0, %v134
    %v136 = vmul.f32 %v125, %v135
    %v137 = vpack.c.bf16 %v136, %v136
    %v138 = vld [vmem:[#allocation7] sm:$0xf]
    %v139 = vld [vmem:[#allocation7 + $0x4] sm:$0xf]
    %v140 = vld [vmem:[#allocation7 + $0x8] sm:$0xf]
    %v141 = vld [vmem:[#allocation7 + $0xc] sm:$0xf]
    %v142 = vld [vmem:[#allocation7 + $0x10] sm:$0xf]
    %v143 = vld [vmem:[#allocation7 + $0x14] sm:$0xf]
    %v144 = vld [vmem:[#allocation7 + $0x18] sm:$0xf]
    %v145 = vld [vmem:[#allocation7 + $0x1c] sm:$0xf]
    %v146 = vld [vmem:[%s4] sm:$0x1]
    %v148 = vlaneseq
    %v149 = vshrl.u32 %v148, 7
    %v150 = vsub.s32 0, %v149
    %v151 = vrot.slane %v146, %v150
    %v161 = vunpack.c.l.b16 %v138
    %v162 = vunpack.c.l.b16 %v139
    %v163 = vunpack.c.l.b16 %v140
    %v164 = vunpack.c.l.b16 %v141
    %v165 = vunpack.c.l.b16 %v142
    %v166 = vunpack.c.l.b16 %v143
    %v167 = vunpack.c.l.b16 %v144
    %v168 = vunpack.c.l.b16 %v145
    %v169 = vpack.c.b16 %v162, %v161
    %v170 = vpack.c.b16 %v164, %v163
    %v171 = vpack.c.b16 %v166, %v165
    %v172 = vpack.c.b16 %v168, %v167
    %vm177 = vcmask 523264
    %v179 = vsel %vm177, %v137, 0
    %181 = vmatprep.subr.bf16.mxu0 0
    %182 = vmatpush1.bf16.msra.mxu0 %v169
    %183 = vmatprep.subr.bf16.mxu0 0
    %184 = vmatpush1.bf16.msra.mxu0 %v170
    %185 = vmatprep.subr.bf16.mxu0 0
    %186 = vmatpush1.bf16.msra.mxu0 %v171
    %187 = vmatprep.subr.bf16.mxu0 0
    %188 = vmatpush1.bf16.msra.mxu0 %v172
    %189 = vmatprep.subr.bf16.mxu0 0
    %190 = vmatpush1.bf16.msra.mxu0 0
    %191 = vmatprep.subr.bf16.mxu0 0
    %192 = vmatpush1.bf16.msra.mxu0 0
    %193 = vmatprep.subr.bf16.mxu0 0
    %194 = vmatpush1.bf16.msra.mxu0 0
    %195 = vmatprep.subr.bf16.mxu0 0
    %196 = vmatpush1.bf16.msra.mxu0 0
    %197 = vmatprep.subr.bf16.mxu0 0
    %198 = vmatpush1.bf16.msra.mxu0 0
    %199 = vmatprep.subr.bf16.mxu0 0
    %200 = vmatpush1.bf16.msra.mxu0 0
    %201 = vmatprep.subr.bf16.mxu0 0
    %202 = vmatpush1.bf16.msra.mxu0 0
    %203 = vmatprep.subr.bf16.mxu0 0
    %204 = vmatpush1.bf16.msra.mxu0 0
    %205 = vmatprep.subr.bf16.mxu0 0
    %206 = vmatpush1.bf16.msra.mxu0 0
    %207 = vmatprep.subr.bf16.mxu0 0
    %208 = vmatpush1.bf16.msra.mxu0 0
    %209 = vmatprep.subr.bf16.mxu0 0
    %210 = vmatpush1.bf16.msra.mxu0 0
    %211 = vmatprep.subr.bf16.mxu0 0
    %212 = vmatpush1.bf16.msra.mxu0 0
    %213 = vmatprep.mubr.bf16.mxu0 0
    %214 = vmatmul.mubr.bf16.gmra.mrb[0].mxu0 %v179
    %v215 = vpop.f32.mrb[0].mxu0
    %v216 = vadd.f32 %v151, %v215
    %v217 = vpop.f32.mrb[0].mxu0
    %v218 = vpop.f32.mrb[0].mxu0
    %v219 = vpop.f32.mrb[0].mxu0
    %220 = vdwg.mxu0
    %v221 = vpack.c.bf16 %v216, %v216
    %222 = vst [vmem:[#allocation8] sm:$0xf] %v221
    // Predicated region
    $region34: #{tpu_custom_call.1} parent=1 // pred_check
      _
    $region35: #{tpu_custom_call.1} parent=1 // pred_check_branch
      %224 = sbr.rel (0) target = $region37
    $region36: #{tpu_custom_call.1} parent=1 // pred_region
      %s226 = ssub.s32 64, 64
      %227 = vsyncadd [#allocation4], %s226
      %s229 = sshll.u32 [#allocation8], 4
      %s230 = int_to_ptr.vmem [resolvable:$true] %s229
      %232 = dma.vmem_to_hbm [thread:$0]  %s230, 64, %s5, [#allocation4]
    $region37: #{tpu_custom_call.1} parent=1 // pred_fallthru
      _
    // Predicated region
    $region38: #{tpu_custom_call.1} parent=1 // pred_check
      _
    $region39: #{tpu_custom_call.1} parent=1 // pred_check_branch
      %234 = sbr.rel (0) target = $region41
    $region40: #{tpu_custom_call.1} parent=1 // pred_region
      %235 = dma.done [#allocation4], 64
    $region41: #{tpu_custom_call.1} parent=1 // pred_fallthru
      _
    %236 = vsyncpa [#allocation3], 1
    %237 = vsyncpa [#allocation6], 1
    %238 = vsyncpa [#allocation4], 1

</llo_original>
